<compile_context>
chip_gen: v5e
topology: v5e:2x2
jax: 0.10.0
libtpu: 0.0.40
codegen_flags: <defaults>
</compile_context>

<pallas_src>
import functools
import math

import jax
import jax.numpy as jnp
from jax.experimental import pallas as pl
from jax.experimental.pallas import tpu as pltpu

_LOG_LO = math.log(1e-8)          # log of the clamp(p, 1e-8, 1 - 1e-8) bounds
_LOG_HI = math.log(1.0 - 1e-8)


def _loss_from_logp(log_p, gamma):
    """Focal loss -clip((1-p)^gamma, 0, 2) * log(p) from log_p (static gamma)."""
    log_p = jnp.clip(log_p, _LOG_LO, _LOG_HI)
    if gamma == 0.0:
        return -log_p
    one_m_p = 1.0 - jnp.exp(log_p)
    if gamma == 1.0:
        focus = one_m_p
    elif gamma == 2.0:
        focus = one_m_p * one_m_p
    else:
        focus = jnp.power(one_m_p, jnp.float32(gamma))
    return -jnp.clip(focus, 0.0, 2.0) * log_p


def _focal_dense_kernel(x_ref, t_ref, *rest, gamma, n_classes, hw,
                        rows_per_blk, needs_mask, has_cw):
    """One grid step: a (C, rows_per_blk, 128) logit slab of one batch elem."""
    if has_cw:
        cw_ref, out_ref, acc_ref = rest
    else:
        cw_ref = None
        out_ref, acc_ref = rest

    j = pl.program_id(1)
    last = pl.num_programs(1) - 1

    @pl.when(j == 0)
    def _init():
        acc_ref[...] = jnp.zeros_like(acc_ref)

    t = t_ref[...]                                       # (rows, 128) int32

    # Pass 1: per-pixel max over the (small, unrolled) class axis.
    m = x_ref[0].astype(jnp.float32)                     # (rows, 128)
    for c in range(1, n_classes):
        m = jnp.maximum(m, x_ref[c].astype(jnp.float32))

    # Pass 2: softmax denominator + select of the target logit / weight.
    x0 = x_ref[0].astype(jnp.float32)
    denom = jnp.exp(x0 - m)
    x_t = x0
    w_t = jnp.full_like(m, cw_ref[0]) if has_cw else None
    for c in range(1, n_classes):
        xc = x_ref[c].astype(jnp.float32)
        denom = denom + jnp.exp(xc - m)
        sel = t == c
        x_t = jnp.where(sel, xc, x_t)
        if has_cw:
            w_t = jnp.where(sel, cw_ref[c], w_t)

    log_p = (x_t - m) - jnp.log(denom)                   # log softmax @ target
    loss = _loss_from_logp(log_p, gamma)                 # (rows, 128)
    if has_cw:
        loss = w_t * loss

    if needs_mask:
        # Only the last block contains out-of-range rows; mask BEFORE any
        # accumulation/reduction so OOB garbage (possibly NaN) is discarded.
        @pl.when(j != last)
        def _full():
            acc_ref[...] += loss

        @pl.when(j == last)
        def _tail():
            row = jax.lax.broadcasted_iota(jnp.int32, loss.shape, 0)
            lane = jax.lax.broadcasted_iota(jnp.int32, loss.shape, 1)
            pos = (j * rows_per_blk + row) * 128 + lane
            acc_ref[...] += jnp.where(pos < hw, loss, 0.0)
    else:
        acc_ref[...] += loss

    @pl.when(j == last)
    def _emit():                                         # (rows,128) -> (1,128)
        out_ref[...] = jnp.sum(acc_ref[...], axis=0, keepdims=True)


def _focal_flat_kernel(x_ref, t_ref, *rest, gamma, n_classes, hw, tile_hw,
                       needs_mask, has_cw):
    """Fallback when H*W is not lane-aligned: (C, tile_hw) slabs."""
    if has_cw:
        cw_ref, out_ref, acc_ref = rest
    else:
        cw_ref = None
        out_ref, acc_ref = rest

    j = pl.program_id(1)
    last = pl.num_programs(1) - 1

    @pl.when(j == 0)
    def _init():
        acc_ref[...] = jnp.zeros_like(acc_ref)

    x = x_ref[...].astype(jnp.float32)                   # (C, TW)
    t = t_ref[...]                                       # (1, TW) int32

    m = jnp.max(x, axis=0, keepdims=True)                # (1, TW)
    denom = jnp.sum(jnp.exp(x - m), axis=0, keepdims=True)
    cls = jax.lax.broadcasted_iota(jnp.int32, x.shape, 0)
    x_t = jnp.sum(jnp.where(cls == t, x, 0.0), axis=0, keepdims=True)

    log_p = (x_t - m) - jnp.log(denom)
    loss = _loss_from_logp(log_p, gamma)                 # (1, TW)
    if has_cw:
        w_t = jnp.full_like(log_p, cw_ref[0])
        for c in range(1, n_classes):
            w_t = jnp.where(t == c, cw_ref[c], w_t)
        loss = w_t * loss

    if needs_mask:
        @pl.when(j != last)
        def _full():
            acc_ref[...] += loss

        @pl.when(j == last)
        def _tail():
            col = j * tile_hw + jax.lax.broadcasted_iota(
                jnp.int32, loss.shape, 1)
            acc_ref[...] += jnp.where(col < hw, loss, 0.0)
    else:
        acc_ref[...] += loss

    @pl.when(j == last)
    def _emit():
        total = jnp.sum(acc_ref[...], axis=1, keepdims=True)    # (1, 1)
        lane = jax.lax.broadcasted_iota(jnp.int32, (1, 128), 1)
        out_ref[...] = jnp.where(lane == 0, total, 0.0)


def _chip_budgets():
    """(max logit-block bytes, scoped VMEM limit) sized per TPU generation."""
    try:
        info = pltpu.get_tpu_info()
        vmem_cap = int(getattr(info, "vmem_capacity_bytes", 0)) or (128 << 20)
    except Exception:                         # no TPU / interpret mode
        vmem_cap = 128 << 20
    if vmem_cap < (100 << 20):                # v7x-class: 64 MiB per TensorCore
        return 4 << 20, 48 << 20
    return 8 << 20, 64 << 20                  # v5e / v6e: 128 MiB VMEM


def robust_focal_loss_2d(logit, target, class_weight=None, gamma=2.0,
                         max_block_bytes=None, vmem_limit_bytes=None,
                         rows_per_blk=None, tile_hw=None):
    """RobustFocalLoss2d(gamma, size_average=True)(logit, target, class_weight,
    type='softmax').  logit: (B, C, H, W); target: (B, H, W) int."""
    # TODO(synk): only the default type='softmax' branch with size_average=True
    # is implemented (sigmoid branch / per-pixel output are separate paths).
    B, C, H, W = logit.shape
    HW = H * W
    N = B * HW
    itemsize = jnp.dtype(logit.dtype).itemsize
    gamma = float(gamma)                      # gamma must be static

    auto_block, auto_vmem = _chip_budgets()
    if max_block_bytes is None:
        max_block_bytes = auto_block
    if vmem_limit_bytes is None:
        vmem_limit_bytes = auto_vmem

    x = logit.reshape(B, C, HW)               # free views, native dtype
    t = target.reshape(B, HW).astype(jnp.int32)
    has_cw = class_weight is not None

    operands = []
    in_specs = []
    if HW % 128 == 0:
        # Lane-dense per-class layout: spatial -> (rows, 128), classes unrolled.
        R = HW // 128
        if rows_per_blk is None:
            max_rows = max(8, (max_block_bytes // (C * 128 * itemsize)) // 8 * 8)
            rows_per_blk = R if R <= max_rows else max_rows
        n_j = pl.cdiv(R, rows_per_blk)
        needs_mask = (R % rows_per_blk) != 0
        operands += [x.reshape(B, C, R, 128), t.reshape(B, R, 128)]
        in_specs += [
            pl.BlockSpec((None, C, rows_per_blk, 128),
                         lambda b, j: (b, 0, j, 0)),
            pl.BlockSpec((None, rows_per_blk, 128), lambda b, j: (b, j, 0)),
        ]
        scratch = [pltpu.VMEM((rows_per_blk, 128), jnp.float32)]
        kernel = functools.partial(
            _focal_dense_kernel, gamma=gamma, n_classes=C, hw=HW,
            rows_per_blk=rows_per_blk, needs_mask=needs_mask, has_cw=has_cw)
    else:
        # TODO(synk): ragged H*W keeps the class axis on (padded) sublanes; a
        # lane-dense variant would require a padded HBM copy of the logits.
        if tile_hw is None:
            budget = max(C * 128 * itemsize, max_block_bytes // 2)
            max_lanes = max(128, (budget // (C * itemsize)) // 128 * 128)
            tile_hw = HW if HW <= max_lanes else max_lanes
        n_j = pl.cdiv(HW, tile_hw)
        needs_mask = (HW % tile_hw) != 0
        operands += [x, t.reshape(B, 1, HW)]
        in_specs += [
            pl.BlockSpec((None, C, tile_hw), lambda b, j: (b, 0, j)),
            pl.BlockSpec((None, 1, tile_hw), lambda b, j: (b, 0, j)),
        ]
        scratch = [pltpu.VMEM((1, tile_hw), jnp.float32)]
        kernel = functools.partial(
            _focal_flat_kernel, gamma=gamma, n_classes=C, hw=HW,
            tile_hw=tile_hw, needs_mask=needs_mask, has_cw=has_cw)

    if has_cw:
        operands.append(jnp.asarray(class_weight, jnp.float32).reshape(C))
        in_specs.append(pl.BlockSpec(memory_space=pltpu.MemorySpace.SMEM))

    out = pl.pallas_call(
        kernel,
        out_shape=jax.ShapeDtypeStruct((B, 1, 128), jnp.float32),
        grid_spec=pltpu.PrefetchScalarGridSpec(
            num_scalar_prefetch=0,
            grid=(B, n_j),
            in_specs=in_specs,
            out_specs=pl.BlockSpec((None, 1, 128), lambda b, j: (b, 0, 0)),
            scratch_shapes=scratch,
        ),
        compiler_params=pltpu.CompilerParams(
            # Per-batch output blocks + per-batch scratch init make the batch
            # axis safely "parallel" (uses both TensorCores on v7x).
            dimension_semantics=("parallel", "arbitrary"),
            vmem_limit_bytes=vmem_limit_bytes),
    )(*operands)

    return jnp.sum(out) / jnp.float32(N)


def _reference(logit, target, class_weight=None, gamma=2.0):
    B, C, H, W = logit.shape
    x = jnp.transpose(logit, (0, 2, 3, 1)).reshape(-1, C).astype(jnp.float32)
    t = target.reshape(-1).astype(jnp.int32)
    prob = jax.nn.softmax(x, axis=1)
    p = jnp.take_along_axis(prob, t[:, None], axis=1)[:, 0]
    p = jnp.clip(p, 1e-8, 1.0 - 1e-8)
    focus = jnp.clip((1.0 - p) ** gamma, 0.0, 2.0)
    w = (jnp.ones_like(p) if class_weight is None
         else jnp.asarray(class_weight, jnp.float32)[t])
    return jnp.mean(-w * focus * jnp.log(p))


if __name__ == "__main__":
    key = jax.random.PRNGKey(0)
    k1, k2, k3, k4, k5, k6 = jax.random.split(key, 6)

    # Test 1: dense lane-aligned path (HW=256), no class weights, single block.
    B, C, H, W = 2, 4, 16, 16
    logit = jax.random.normal(k1, (B, C, H, W), dtype=jnp.float32)
    target = jax.random.randint(k2, (B, H, W), 0, C, dtype=jnp.int32)
    loss = jax.block_until_ready(robust_focal_loss_2d(logit, target))
    ref = _reference(logit, target)
    assert jnp.allclose(loss, ref, rtol=1e-5, atol=1e-6), (loss, ref)

    # Test 2: ragged-HW fallback (HW=320), class weights, multi-block + tail mask.
    B2, C2, H2, W2 = 2, 5, 16, 20
    logit2 = jax.random.normal(k3, (B2, C2, H2, W2), dtype=jnp.float32)
    target2 = jax.random.randint(k4, (B2, H2, W2), 0, C2, dtype=jnp.int32)
    cw2 = jnp.array([0.5, 1.0, 2.0, 1.5, 0.25], jnp.float32)
    loss2 = jax.block_until_ready(
        robust_focal_loss_2d(logit2, target2, class_weight=cw2, tile_hw=128))
    ref2 = _reference(logit2, target2, class_weight=cw2)
    assert jnp.allclose(loss2, ref2, rtol=1e-5, atol=1e-6), (loss2, ref2)

    # Test 3: dense path, bf16 logits, class weights, multi-block with a ragged
    # last row-block (R=18 rows of 128 lanes, 8 rows per block).
    B3, C3, H3, W3 = 2, 3, 48, 48
    logit3 = jax.random.normal(k5, (B3, C3, H3, W3), dtype=jnp.bfloat16)
    target3 = jax.random.randint(k6, (B3, H3, W3), 0, C3, dtype=jnp.int32)
    cw3 = jnp.array([1.5, 0.5, 1.0], jnp.float32)
    loss3 = jax.block_until_ready(
        robust_focal_loss_2d(logit3, target3, class_weight=cw3, rows_per_blk=8))
    ref3 = _reference(logit3, target3, class_weight=cw3)
    assert jnp.allclose(loss3, ref3, rtol=1e-4, atol=1e-5), (loss3, ref3)

    print("KERNEL_OK")
</pallas_src>

<mosaic_0001>
module attributes {stable_mosaic.version = 11 : i64} {
  func.func @_focal_dense_kernel(%arg0: i32, %arg1: i32, %arg2: memref<1x4x2x128xf32, #tpu.memory_space<vmem>>, %arg3: memref<1x2x128xi32, #tpu.memory_space<vmem>>, %arg4: memref<1x1x128xf32, #tpu.memory_space<vmem>>, %arg5: memref<2x128xf32, #tpu.memory_space<vmem>>) attributes {dimension_semantics = [#tpu.dimension_semantics<parallel>, #tpu.dimension_semantics<arbitrary>], iteration_bounds = array<i64: 2, 1>, scalar_prefetch = 0 : i64, scratch_operands = 1 : i64, tpu.core_type = #tpu.core_type<tc>, window_params = [{transform_indices = @transform_0, window_bounds = array<i64: 1, 4, 2, 128>}, {transform_indices = @transform_1, window_bounds = array<i64: 1, 2, 128>}, {transform_indices = @transform_2, window_bounds = array<i64: 1, 1, 128>}]} {
    %c0_i32 = arith.constant 0 : i32
    %0 = arith.cmpi eq, %arg1, %c0_i32 : i32
    %1 = arith.extui %0 : i1 to i32
    %c0_i32_0 = arith.constant 0 : i32
    %2 = arith.cmpi ne, %1, %c0_i32_0 : i32
    scf.if %2 {
      %cst_43 = arith.constant 0.000000e+00 : f32
      %68 = vector.broadcast %cst_43 : f32 to vector<2x128xf32>
      %c0_44 = arith.constant 0 : index
      %c0_45 = arith.constant 0 : index
      %69 = vector.load %arg5[%c0_44, %c0_45] : memref<2x128xf32, #tpu.memory_space<vmem>>, vector<2x128xf32>
      tpu.vector_store %arg5[%c0_44, %c0_45], %68 {strides = array<i32>} : memref<2x128xf32, #tpu.memory_space<vmem>>, vector<2x128xf32>,
    } else {
    }
    %c0 = arith.constant 0 : index
    %c0_1 = arith.constant 0 : index
    %c0_2 = arith.constant 0 : index
    %3 = vector.load %arg3[%c0, %c0_1, %c0_2] : memref<1x2x128xi32, #tpu.memory_space<vmem>>, vector<1x2x128xi32>
    %4 = vector.shape_cast %3 : vector<1x2x128xi32> to vector<2x128xi32>
    %c0_3 = arith.constant 0 : index
    %c0_4 = arith.constant 0 : index
    %c0_5 = arith.constant 0 : index
    %c0_6 = arith.constant 0 : index
    %5 = vector.load %arg2[%c0_3, %c0_4, %c0_5, %c0_6] : memref<1x4x2x128xf32, #tpu.memory_space<vmem>>, vector<1x1x2x128xf32>
    %6 = vector.shape_cast %5 : vector<1x1x2x128xf32> to vector<2x128xf32>
    %c0_7 = arith.constant 0 : index
    %c1 = arith.constant 1 : index
    %c0_8 = arith.constant 0 : index
    %c0_9 = arith.constant 0 : index
    %7 = vector.load %arg2[%c0_7, %c1, %c0_8, %c0_9] : memref<1x4x2x128xf32, #tpu.memory_space<vmem>>, vector<1x1x2x128xf32>
    %8 = vector.shape_cast %7 : vector<1x1x2x128xf32> to vector<2x128xf32>
    %9 = arith.maximumf %6, %8 : vector<2x128xf32>
    %c0_10 = arith.constant 0 : index
    %c2 = arith.constant 2 : index
    %c0_11 = arith.constant 0 : index
    %c0_12 = arith.constant 0 : index
    %10 = vector.load %arg2[%c0_10, %c2, %c0_11, %c0_12] : memref<1x4x2x128xf32, #tpu.memory_space<vmem>>, vector<1x1x2x128xf32>
    %11 = vector.shape_cast %10 : vector<1x1x2x128xf32> to vector<2x128xf32>
    %12 = arith.maximumf %9, %11 : vector<2x128xf32>
    %c0_13 = arith.constant 0 : index
    %c3 = arith.constant 3 : index
    %c0_14 = arith.constant 0 : index
    %c0_15 = arith.constant 0 : index
    %13 = vector.load %arg2[%c0_13, %c3, %c0_14, %c0_15] : memref<1x4x2x128xf32, #tpu.memory_space<vmem>>, vector<1x1x2x128xf32>
    %14 = vector.shape_cast %13 : vector<1x1x2x128xf32> to vector<2x128xf32>
    %15 = arith.maximumf %12, %14 : vector<2x128xf32>
    %c0_16 = arith.constant 0 : index
    %c0_17 = arith.constant 0 : index
    %c0_18 = arith.constant 0 : index
    %c0_19 = arith.constant 0 : index
    %16 = vector.load %arg2[%c0_16, %c0_17, %c0_18, %c0_19] : memref<1x4x2x128xf32, #tpu.memory_space<vmem>>, vector<1x1x2x128xf32>
    %17 = vector.shape_cast %16 : vector<1x1x2x128xf32> to vector<2x128xf32>
    %18 = arith.subf %17, %15 : vector<2x128xf32>
    %19 = math.exp %18 : vector<2x128xf32>
    %c0_20 = arith.constant 0 : index
    %c1_21 = arith.constant 1 : index
    %c0_22 = arith.constant 0 : index
    %c0_23 = arith.constant 0 : index
    %20 = vector.load %arg2[%c0_20, %c1_21, %c0_22, %c0_23] : memref<1x4x2x128xf32, #tpu.memory_space<vmem>>, vector<1x1x2x128xf32>
    %21 = vector.shape_cast %20 : vector<1x1x2x128xf32> to vector<2x128xf32>
    %22 = arith.subf %21, %15 : vector<2x128xf32>
    %23 = math.exp %22 : vector<2x128xf32>
    %24 = arith.addf %19, %23 : vector<2x128xf32>
    %c1_i32 = arith.constant 1 : i32
    %25 = vector.broadcast %c1_i32 : i32 to vector<2x128xi32>
    %26 = arith.cmpi eq, %4, %25 : vector<2x128xi32>
    %27 = arith.select %26, %21, %17 : vector<2x128xi1>, vector<2x128xf32>
    %c0_24 = arith.constant 0 : index
    %c2_25 = arith.constant 2 : index
    %c0_26 = arith.constant 0 : index
    %c0_27 = arith.constant 0 : index
    %28 = vector.load %arg2[%c0_24, %c2_25, %c0_26, %c0_27] : memref<1x4x2x128xf32, #tpu.memory_space<vmem>>, vector<1x1x2x128xf32>
    %29 = vector.shape_cast %28 : vector<1x1x2x128xf32> to vector<2x128xf32>
    %30 = arith.subf %29, %15 : vector<2x128xf32>
    %31 = math.exp %30 : vector<2x128xf32>
    %32 = arith.addf %24, %31 : vector<2x128xf32>
    %c2_i32 = arith.constant 2 : i32
    %33 = vector.broadcast %c2_i32 : i32 to vector<2x128xi32>
    %34 = arith.cmpi eq, %4, %33 : vector<2x128xi32>
    %35 = arith.select %34, %29, %27 : vector<2x128xi1>, vector<2x128xf32>
    %c0_28 = arith.constant 0 : index
    %c3_29 = arith.constant 3 : index
    %c0_30 = arith.constant 0 : index
    %c0_31 = arith.constant 0 : index
    %36 = vector.load %arg2[%c0_28, %c3_29, %c0_30, %c0_31] : memref<1x4x2x128xf32, #tpu.memory_space<vmem>>, vector<1x1x2x128xf32>
    %37 = vector.shape_cast %36 : vector<1x1x2x128xf32> to vector<2x128xf32>
    %38 = arith.subf %37, %15 : vector<2x128xf32>
    %39 = math.exp %38 : vector<2x128xf32>
    %40 = arith.addf %32, %39 : vector<2x128xf32>
    %c3_i32 = arith.constant 3 : i32
    %41 = vector.broadcast %c3_i32 : i32 to vector<2x128xi32>
    %42 = arith.cmpi eq, %4, %41 : vector<2x128xi32>
    %43 = arith.select %42, %37, %35 : vector<2x128xi1>, vector<2x128xf32>
    %44 = arith.subf %43, %15 : vector<2x128xf32>
    %45 = math.log %40 : vector<2x128xf32>
    %46 = arith.subf %44, %45 : vector<2x128xf32>
    %cst = arith.constant -18.420681 : f32
    %cst_32 = arith.constant -9.99999993E-9 : f32
    %47 = vector.broadcast %cst : f32 to vector<2x128xf32>
    %48 = arith.maximumf %47, %46 : vector<2x128xf32>
    %49 = vector.broadcast %cst_32 : f32 to vector<2x128xf32>
    %50 = arith.minimumf %49, %48 : vector<2x128xf32>
    %51 = math.exp %50 : vector<2x128xf32>
    %cst_33 = arith.constant 1.000000e+00 : f32
    %52 = vector.broadcast %cst_33 : f32 to vector<2x128xf32>
    %53 = arith.subf %52, %51 : vector<2x128xf32>
    %54 = arith.mulf %53, %53 : vector<2x128xf32>
    %cst_34 = arith.constant 0.000000e+00 : f32
    %cst_35 = arith.constant 2.000000e+00 : f32
    %55 = vector.broadcast %cst_34 : f32 to vector<2x128xf32>
    %56 = arith.maximumf %55, %54 : vector<2x128xf32>
    %57 = vector.broadcast %cst_35 : f32 to vector<2x128xf32>
    %58 = arith.minimumf %57, %56 : vector<2x128xf32>
    %cst_36 = arith.constant 0.000000e+00 : f32
    %59 = vector.broadcast %cst_36 : f32 to vector<2x128xf32>
    %60 = arith.subf %59, %58 : vector<2x128xf32>
    %61 = arith.mulf %60, %50 : vector<2x128xf32>
    %c0_37 = arith.constant 0 : index
    %c0_38 = arith.constant 0 : index
    %62 = vector.load %arg5[%c0_37, %c0_38] : memref<2x128xf32, #tpu.memory_space<vmem>>, vector<2x128xf32>
    %63 = arith.addf %62, %61 : vector<2x128xf32>
    %c0_39 = arith.constant 0 : index
    %c0_40 = arith.constant 0 : index
    %64 = vector.load %arg5[%c0_39, %c0_40] : memref<2x128xf32, #tpu.memory_space<vmem>>, vector<2x128xf32>
    tpu.vector_store %arg5[%c0_39, %c0_40], %63 {strides = array<i32>} : memref<2x128xf32, #tpu.memory_space<vmem>>, vector<2x128xf32>,
    %c0_i32_41 = arith.constant 0 : i32
    %65 = arith.cmpi eq, %arg1, %c0_i32_41 : i32
    %66 = arith.extui %65 : i1 to i32
    %c0_i32_42 = arith.constant 0 : i32
    %67 = arith.cmpi ne, %66, %c0_i32_42 : i32
    scf.if %67 {
      %c0_43 = arith.constant 0 : index
      %c0_44 = arith.constant 0 : index
      %68 = vector.load %arg5[%c0_43, %c0_44] : memref<2x128xf32, #tpu.memory_space<vmem>>, vector<2x128xf32>
      %cst_45 = arith.constant dense<0.000000e+00> : vector<128xf32>
      %69 = vector.multi_reduction <add>, %68, %cst_45 [0] : vector<2x128xf32> to vector<128xf32>
      %70 = vector.shape_cast %69 : vector<128xf32> to vector<1x128xf32>
      %c0_46 = arith.constant 0 : index
      %c0_47 = arith.constant 0 : index
      %c0_48 = arith.constant 0 : index
      %71 = vector.load %arg4[%c0_46, %c0_47, %c0_48] : memref<1x1x128xf32, #tpu.memory_space<vmem>>, vector<1x1x128xf32>
      %72 = vector.shape_cast %71 : vector<1x1x128xf32> to vector<1x128xf32>
      %73 = vector.shape_cast %70 : vector<1x128xf32> to vector<1x1x128xf32>
      tpu.vector_store %arg4[%c0_46, %c0_47, %c0_48], %73 {strides = array<i32>} : memref<1x1x128xf32, #tpu.memory_space<vmem>>, vector<1x1x128xf32>,
    } else {
    }
    return
  }
  func.func @transform_0(%arg0: i32, %arg1: i32) -> (i32, i32, i32, i32) {
    %c0_i32 = arith.constant 0 : i32
    %c0_i32_0 = arith.constant 0 : i32
    %c0_i32_1 = arith.constant 0 : i32
    return %arg0, %c0_i32, %arg1, %c0_i32_0 : i32, i32, i32, i32
  }
  func.func @transform_1(%arg0: i32, %arg1: i32) -> (i32, i32, i32) {
    %c0_i32 = arith.constant 0 : i32
    %c0_i32_0 = arith.constant 0 : i32
    return %arg0, %arg1, %c0_i32 : i32, i32, i32
  }
  func.func @transform_2(%arg0: i32, %arg1: i32) -> (i32, i32, i32) {
    %c0_i32 = arith.constant 0 : i32
    %c0_i32_0 = arith.constant 0 : i32
    %c0_i32_1 = arith.constant 0 : i32
    return %arg0, %c0_i32, %c0_i32_0 : i32, i32, i32
  }
}

</mosaic_0001>

<llo_original>
// kernel: tpu_custom_call.1
$region0: #{tpu_custom_call.1}
  #allocation0 [shape = 'u32[]', space=smem, size = 0x4, offset = 0x4, fixed_abs, tag = 'smem constant byte address 0x4 - core index']
  #allocation1 [shape = 'u32[72,128]{1,0:T(1,128)}', space=vmem, size = 0x9000, scoped, tag = 'internal scratch']
  #allocation2 [shape = 'f32[2,128]{1,0:T(2,128)}', space=vmem, size = 0x400, scoped, tag = 'scratch operand']
  %s0 = inlined_call_operand.hbm [shape: f32[2,4,2,128], index: 0, kind: input, shape index: {}]
  %s1 = inlined_call_operand.hbm [shape: s32[2,2,128], index: 1, kind: input, shape index: {}]
  %s2 = inlined_call_operand.hbm [shape: f32[2,1,128], index: 2, kind: output, shape index: {}]
  %s3 = sld [smem:[#allocation0]]
  $region57: #{tpu_custom_call.1} parent=0
    _
  %s5 = ssub.s32 1, %s3
  %s6 = scalar_select 0, %s5, %s3
  $region1: #{tpu_custom_call.1} parent=0
    #allocation3 [shape = 'u8[8192]{0}', space=vmem, size = 0x2000, scoped, tag = 'input window, operand 0']
    #allocation4 [shape = 's32[2]{0}', space=sflag, size = 0x8, scoped, tag = 'scoped memory for tpu_custom_call.1']
    #allocation5 [shape = 's32[2]{0}', space=sflag, size = 0x8, scoped, tag = 'scoped memory for tpu_custom_call.1']
    #allocation6 [shape = 'u8[2048]{0}', space=vmem, size = 0x800, scoped, tag = 'input window, operand 1']
    #allocation7 [shape = 's32[2]{0}', space=sflag, size = 0x8, scoped, tag = 'scoped memory for tpu_custom_call.1']
    #allocation8 [shape = 'u8[1024]{0}', space=vmem, size = 0x400, scoped, tag = 'output window, operand 0']
    %7 = vsyncpa [#allocation4], 0
    %s8 = scalar_lea.sflag [#allocation4], 1
    %9 = vsyncpa %s8, 0
    %10 = vsyncpa [#allocation7], 0
    %s11 = scalar_lea.sflag [#allocation7], 1
    %12 = vsyncpa %s11, 0
    %13 = vsyncpa [#allocation5], 0
    %s14 = scalar_lea.sflag [#allocation5], 1
    %15 = vsyncpa %s14, 0
    loop: start=0, step=1, limit=4
    $region2: #{tpu_custom_call.1} parent=1 // loop_pre_header
      _
    $region3: #{tpu_custom_call.1} parent=1 // loop_header
      %s17 = sphi 0, %s21
      %p18 = scmp.ge.s32.totalorder %s17, 4
      %s24 = sphi 0, %s36
      %s25 = sphi 0, %s32
      %s26 = sphi 0, %s24
      %s27 = sphi 0, %s25
      %s28 = sphi 0, %s26
      %s29 = sphi 0, %s27
      %s41 = sphi 0, %s43
      %s44 = sphi 0, %s41
      %s45 = sphi 0, %s44
      %s61 = sphi 0, %s45
      %s69 = sphi 0, %s71
      %s72 = sphi 0, %s69
      %s73 = sphi 0, %s72
      %s89 = sphi 0, %s73
      %s95 = sphi 0, %s97
      %s98 = sphi 0, %s95
      %s99 = sphi 0, %s98
      %s115 = sphi 0, %s99
    $region4: #{tpu_custom_call.1} parent=1 // loop_header_branch
      %20 = sbr.rel (%p18) target = $region8
    $region5: #{tpu_custom_call.1} parent=1 // loop_body
      %s22 = ssub.s32 %s17, 1
      %s23 = ssub.s32 %s17, 2
      %s30 = sadd.s32 1, %s25
      %p31 = scmp.ge.s32.totalorder %s30, 1
      %s32 = scalar_select %p31, 0, %s30
      %s33 = sadd.s32 1, %s24
      %s34 = scalar_select %p31, %s33, %s24
      %p35 = scmp.ge.s32.totalorder %s34, 2
      %s36 = scalar_select %p35, 0, %s34
      %s37 = ssub.s32 %s24, %s36
      %s38 = ssub.s32 %s25, %s32
      %s39 = sor.u32 %s37, %s38
      %p40 = scmp.eq.s32.totalorder %s39, 0
      %s42 = sadd.s32 %s41, 1
      %s43 = scalar_select %p40, %s41, %s42
      %p46 = pneg %p40
      %p47 = scmp.eq.s32.totalorder %s17, 1
      %p48 = por %p46, %p47
      %p49 = scmp.ne.s32.totalorder %s41, %s44
      %p50 = scmp.eq.s32.totalorder %s17, 0
      %p51 = por %p49, %p50
      %p52 = scmp.ne.s32.totalorder %s41, %s44
      %p53 = scmp.eq.s32.totalorder %s22, 1
      %p54 = por %p52, %p53
      %p55 = scmp.ne.s32.totalorder %s44, %s45
      %p56 = scmp.eq.s32.totalorder %s22, 0
      %p57 = por %p55, %p56
      %p58 = scmp.ne.s32.totalorder %s44, %s45
      %p59 = scmp.eq.s32.totalorder %s23, 1
      %p60 = por %p58, %p59
      %p62 = scmp.ne.s32.totalorder %s45, %s61
      %p63 = scmp.eq.s32.totalorder %s23, 0
      %p64 = por %p62, %p63
      %s65 = ssub.s32 %s24, %s36
      %s66 = ssub.s32 %s25, %s32
      %s67 = sor.u32 %s65, %s66
      %p68 = scmp.eq.s32.totalorder %s67, 0
      %s70 = sadd.s32 %s69, 1
      %s71 = scalar_select %p68, %s69, %s70
      %p74 = pneg %p68
      %p75 = scmp.eq.s32.totalorder %s17, 1
      %p76 = por %p74, %p75
      %p77 = scmp.ne.s32.totalorder %s69, %s72
      %p78 = scmp.eq.s32.totalorder %s17, 0
      %p79 = por %p77, %p78
      %p80 = scmp.ne.s32.totalorder %s69, %s72
      %p81 = scmp.eq.s32.totalorder %s22, 1
      %p82 = por %p80, %p81
      %p83 = scmp.ne.s32.totalorder %s72, %s73
      %p84 = scmp.eq.s32.totalorder %s22, 0
      %p85 = por %p83, %p84
      %p86 = scmp.ne.s32.totalorder %s72, %s73
      %p87 = scmp.eq.s32.totalorder %s23, 1
      %p88 = por %p86, %p87
      %p90 = scmp.ne.s32.totalorder %s73, %s89
      %p91 = scmp.eq.s32.totalorder %s23, 0
      %p92 = por %p90, %p91
      %s93 = ssub.s32 %s24, %s36
      %p94 = scmp.eq.s32.totalorder %s93, 0
      %s96 = sadd.s32 %s95, 1
      %s97 = scalar_select %p94, %s95, %s96
      %p100 = pneg %p94
      %p101 = scmp.eq.s32.totalorder %s17, 1
      %p102 = por %p100, %p101
      %p103 = scmp.ne.s32.totalorder %s95, %s98
      %p104 = scmp.eq.s32.totalorder %s17, 0
      %p105 = por %p103, %p104
      %p106 = scmp.ne.s32.totalorder %s95, %s98
      %p107 = scmp.eq.s32.totalorder %s22, 1
      %p108 = por %p106, %p107
      %p109 = scmp.ne.s32.totalorder %s98, %s99
      %p110 = scmp.eq.s32.totalorder %s22, 0
      %p111 = por %p109, %p110
      %p112 = scmp.ne.s32.totalorder %s98, %s99
      %p113 = scmp.eq.s32.totalorder %s23, 1
      %p114 = por %p112, %p113
      %p116 = scmp.ne.s32.totalorder %s99, %s115
      %p117 = scmp.eq.s32.totalorder %s23, 0
      %p118 = por %p116, %p117
      %p119 = scmp.le.s32.totalorder 1, %s17
      %p120 = scmp.lt.s32.totalorder %s17, 3
      %p121 = pnand %p119, %p120
      %p122 = pneg %p121
      // Predicated region
      $region9: #{tpu_custom_call.1} parent=5 // pred_check
        _
      $region10: #{tpu_custom_call.1} parent=5 // pred_check_branch
        %124 = sbr.rel (%p121) target = $region12
      $region11: #{tpu_custom_call.1} parent=5 // pred_region
        %s125 = ssub.s32 %s17, 1
      $region12: #{tpu_custom_call.1} parent=5 // pred_fallthru
        _
      %p126 = scmp.lt.s32.totalorder %s17, 2
      // Predicated region
      $region13: #{tpu_custom_call.1} parent=5 // pred_check
        %p127 = pneg %p126
      $region14: #{tpu_custom_call.1} parent=5 // pred_check_branch
        %129 = sbr.rel (%p127) target = $region16
      $region15: #{tpu_custom_call.1} parent=5 // pred_region
        // Predicated region
        $region17: #{tpu_custom_call.1} parent=15 // pred_check
          %p130 = pneg %p51
        $region18: #{tpu_custom_call.1} parent=15 // pred_check_branch
          %132 = sbr.rel (%p130) target = $region20
        $region19: #{tpu_custom_call.1} parent=15 // pred_region
          %s133 = sand.u32 %s41, 1
          %s134 = scalar_lea.sflag [#allocation4], %s133
          %s135 = sand.u32 %s41, 1
          %s136 = smul.addr %s135, 8
          %s137 = scalar_lea.vmem [#allocation3], %s136
          %139 = vsyncadd %s134, 0
          %s140 = smul.addr %s24, 4
          %s141 = sadd.s32 %s25, %s140
          %s142 = smul.addr %s141, 2
          %s143 = scalar_lea.hbm %s0, %s142
          %s144 = sshll.u32 %s143, 4
          %s145 = int_to_ptr.hbm [resolvable:$true] %s144
          %s146 = sshll.u32 %s137, 4
          %s147 = int_to_ptr.vmem [resolvable:$true] %s146
          %152 = dma.hbm_to_vmem [thread:$0]  %s145, 128, %s147, %s134, 32, 32, 2
        $region20: #{tpu_custom_call.1} parent=15 // pred_fallthru
          _
        // Predicated region
        $region21: #{tpu_custom_call.1} parent=15 // pred_check
          %p153 = pneg %p79
        $region22: #{tpu_custom_call.1} parent=15 // pred_check_branch
          %155 = sbr.rel (%p153) target = $region24
        $region23: #{tpu_custom_call.1} parent=15 // pred_region
          %s156 = sand.u32 %s69, 1
          %s157 = scalar_lea.sflag [#allocation7], %s156
          %s158 = sand.u32 %s69, 1
          %s159 = smul.addr %s158, 2
          %s160 = scalar_lea.vmem [#allocation6], %s159
          %162 = vsyncadd %s157, 0
          %s163 = sadd.s32 %s25, %s24
          %s164 = smul.addr %s163, 2
          %s165 = scalar_lea.hbm %s1, %s164
          %s167 = sshll.u32 %s165, 4
          %s168 = int_to_ptr.hbm [resolvable:$true] %s167
          %s169 = sshll.u32 %s160, 4
          %s170 = int_to_ptr.vmem [resolvable:$true] %s169
          %172 = dma.hbm_to_vmem [thread:$0]  %s168, 32, %s170, %s157
        $region24: #{tpu_custom_call.1} parent=15 // pred_fallthru
          _
      $region16: #{tpu_custom_call.1} parent=5 // pred_fallthru
        _
      %p173 = scmp.le.s32.totalorder 1, %s17
      %p174 = scmp.lt.s32.totalorder %s17, 3
      %p175 = pnand %p173, %p174
      %p176 = pneg %p175
      // Predicated region
      $region25: #{tpu_custom_call.1} parent=5 // pred_check
        _
      $region26: #{tpu_custom_call.1} parent=5 // pred_check_branch
        %178 = sbr.rel (%p175) target = $region28
      $region27: #{tpu_custom_call.1} parent=5 // pred_region
        %s179 = ssub.s32 %s17, 1
        %s180 = sand.u32 %s44, 1
        %s181 = scalar_lea.sflag [#allocation4], %s180
        %s182 = sand.u32 %s44, 1
        %s183 = smul.addr %s182, 8
        %s184 = scalar_lea.vmem [#allocation3], %s183
        // Predicated region
        $region29: #{tpu_custom_call.1} parent=27 // pred_check
          %p185 = pneg %p57
        $region30: #{tpu_custom_call.1} parent=27 // pred_check_branch
          %187 = sbr.rel (%p185) target = $region32
        $region31: #{tpu_custom_call.1} parent=27 // pred_region
          %189 = dma.done %s181, 128
        $region32: #{tpu_custom_call.1} parent=27 // pred_fallthru
          _
        %s190 = sand.u32 %s72, 1
        %s191 = scalar_lea.sflag [#allocation7], %s190
        %s192 = sand.u32 %s72, 1
        %s193 = smul.addr %s192, 2
        %s194 = scalar_lea.vmem [#allocation6], %s193
        // Predicated region
        $region33: #{tpu_custom_call.1} parent=27 // pred_check
          %p195 = pneg %p85
        $region34: #{tpu_custom_call.1} parent=27 // pred_check_branch
          %197 = sbr.rel (%p195) target = $region36
        $region35: #{tpu_custom_call.1} parent=27 // pred_region
          %199 = dma.done %s191, 32
        $region36: #{tpu_custom_call.1} parent=27 // pred_fallthru
          _
        %s200 = sand.u32 %s44, 1
        %s201 = scalar_lea.sflag [#allocation4], %s200
        %s202 = sand.u32 %s44, 1
        %s203 = smul.addr %s202, 8
        %s204 = scalar_lea.vmem [#allocation3], %s203
        %p205 = pneg %p57
        %p206 = pneg %p54
        %s207 = sand.u32 %s72, 1
        %s208 = scalar_lea.sflag [#allocation7], %s207
        %s209 = sand.u32 %s72, 1
        %s210 = smul.addr %s209, 2
        %s211 = scalar_lea.vmem [#allocation6], %s210
        %p212 = pneg %p85
        %p213 = pneg %p82
        %p214 = pneg %p111
        %p215 = pneg %p108
        %s216 = sand.u32 %s98, 1
        %s217 = scalar_lea.sflag [#allocation5], %s216
        %s218 = sand.u32 %s98, 1
        %s219 = scalar_lea.vmem [#allocation8], %s218
        %p220 = scmp.eq.s32.totalorder %s27, 0
        // Predicated region
        $region37: #{tpu_custom_call.1} parent=27 // pred_check
          %p221 = pneg %p220
        $region38: #{tpu_custom_call.1} parent=27 // pred_check_branch
          %223 = sbr.rel (%p221) target = $region40
        $region39: #{tpu_custom_call.1} parent=27 // pred_region
          %224 = vst [vmem:[#allocation2] sm:$0x3] 0.0
        $region40: #{tpu_custom_call.1} parent=27 // pred_fallthru
          _
        %v225 = vld [vmem:[%s194] sm:$0x3]
        %v226 = vld [vmem:[%s184] sm:$0x3]
        %s227 = scalar_lea.vmem %s184, 2 [#allocation3]
        %v228 = vld [vmem:[%s227] sm:$0x3]
        %v229 = vmax.f32 %v226, %v228
        %s230 = scalar_lea.vmem %s184, 4 [#allocation3]
        %v231 = vld [vmem:[%s230] sm:$0x3]
        %v232 = vmax.f32 %v229, %v231
        %s233 = scalar_lea.vmem %s184, 6 [#allocation3]
        %v234 = vld [vmem:[%s233] sm:$0x3]
        %v235 = vmax.f32 %v232, %v234
        %v236 = vsub.f32 %v226, %v235
        %v237 = vmul.f32 %v236, 1.442695
        %v238 = vpow.pop %v237
        %v239 = vsub.f32 %v228, %v235
        %v240 = vmul.f32 %v239, 1.442695
        %v241 = vpow.pop %v240
        %v242 = vadd.f32 %v238, %v241
        %vm243 = vcmp.eq.s32.totalorder %v225, 1
        %v244 = vsel %vm243, %v228, %v226
        %v245 = vsub.f32 %v231, %v235
        %v246 = vmul.f32 %v245, 1.442695
        %v247 = vpow.pop %v246
        %v248 = vadd.f32 %v242, %v247
        %vm249 = vcmp.eq.s32.totalorder %v225, 2
        %v250 = vsel %vm249, %v231, %v244
        %v251 = vsub.f32 %v234, %v235
        %v252 = vmul.f32 %v251, 1.442695
        %v253 = vpow.pop %v252
        %v254 = vadd.f32 %v248, %v253
        %vm255 = vcmp.eq.s32.totalorder %v225, 3
        %v256 = vsel %vm255, %v234, %v250
        %v257 = vsub.f32 %v256, %v235
        %v258 = vlog2.pop %v254
        %v259 = vmul.f32 %v258, 0.6931472
        %v260 = vsub.f32 %v257, %v259
        %v261 = vmax.f32 %v260, -18.420681
        %v262 = vmin.f32 %v261, -1e-08
        %v263 = vmul.f32 %v262, 1.442695
        %v264 = vpow.pop %v263
        %v265 = vsub.f32 1.0, %v264
        %v266 = vmul.f32 %v265, %v265
        %v267 = vmax.f32 %v266, 0.0
        %v268 = vmin.f32 %v267, 2.0
        %v269 = vsub.f32 0.0, %v268
        %v270 = vmul.f32 %v269, %v262
        %v271 = vld [vmem:[#allocation2] sm:$0x3]
        %v272 = vadd.f32 %v271, %v270
        %273 = vst [vmem:[#allocation2] sm:$0x3] %v272
        // Predicated region
        $region41: #{tpu_custom_call.1} parent=27 // pred_check
          %p274 = pneg %p220
        $region42: #{tpu_custom_call.1} parent=27 // pred_check_branch
          %276 = sbr.rel (%p274) target = $region44
        $region43: #{tpu_custom_call.1} parent=27 // pred_region
          %v277 = vld [vmem:[#allocation2] sm:$0x3]
          %vm278 = vcmask 1041408
          %v279 = vsel %vm278, %v277, 0.0
          %v280 = vrot.slane %v279, 4
          %v281 = vadd.f32 %v279, %v280
          %v282 = vrot.slane %v281, 2
          %v283 = vadd.f32 %v281, %v282
          %v284 = vrot.slane %v283, 1
          %v285 = vadd.f32 %v283, %v284
          %286 = vst [vmem:[%s219] sm:$0x1] %v285
        $region44: #{tpu_custom_call.1} parent=27 // pred_fallthru
          _
        %s287 = sand.u32 %s98, 1
        %s288 = scalar_lea.sflag [#allocation5], %s287
        %s289 = sand.u32 %s98, 1
        %s290 = scalar_lea.vmem [#allocation8], %s289
        // Predicated region
        $region45: #{tpu_custom_call.1} parent=27 // pred_check
          %p291 = pneg %p108
        $region46: #{tpu_custom_call.1} parent=27 // pred_check_branch
          %293 = sbr.rel (%p291) target = $region48
        $region47: #{tpu_custom_call.1} parent=27 // pred_region
          %295 = vsyncadd %s288, 0
          %s296 = scalar_lea.hbm %s2, %s26
          %s298 = sshll.u32 %s290, 4
          %s299 = int_to_ptr.vmem [resolvable:$true] %s298
          %s300 = sshll.u32 %s296, 4
          %s301 = int_to_ptr.hbm [resolvable:$true] %s300
          %303 = dma.vmem_to_hbm [thread:$0]  %s299, 16, %s301, %s288
        $region48: #{tpu_custom_call.1} parent=27 // pred_fallthru
          _
      $region28: #{tpu_custom_call.1} parent=5 // pred_fallthru
        _
      %p304 = scmp.le.s32.totalorder 2, %s17
      // Predicated region
      $region49: #{tpu_custom_call.1} parent=5 // pred_check
        %p305 = pneg %p304
      $region50: #{tpu_custom_call.1} parent=5 // pred_check_branch
        %307 = sbr.rel (%p305) target = $region52
      $region51: #{tpu_custom_call.1} parent=5 // pred_region
        %s308 = ssub.s32 %s17, 2
        // Predicated region
        $region53: #{tpu_custom_call.1} parent=51 // pred_check
          %p309 = pneg %p114
        $region54: #{tpu_custom_call.1} parent=51 // pred_check_branch
          %311 = sbr.rel (%p309) target = $region56
        $region55: #{tpu_custom_call.1} parent=51 // pred_region
          %s312 = sand.u32 %s99, 1
          %s313 = scalar_lea.sflag [#allocation5], %s312
          %s314 = sand.u32 %s99, 1
          %s315 = scalar_lea.vmem [#allocation8], %s314
          %317 = dma.done %s313, 16
        $region56: #{tpu_custom_call.1} parent=51 // pred_fallthru
          _
      $region52: #{tpu_custom_call.1} parent=5 // pred_fallthru
        _
    $region6: #{tpu_custom_call.1} parent=1 // loop_footer
      %s21 = sadd.s32 1, %s17
    $region7: #{tpu_custom_call.1} parent=1 // loop_footer_branch
      %16 = sbr.rel target = $region3
    $region8: #{tpu_custom_call.1} parent=1 // loop_exit
      _
    %318 = vsyncpa [#allocation4], 1
    %s319 = scalar_lea.sflag [#allocation4], 1
    %320 = vsyncpa %s319, 1
    %321 = vsyncpa [#allocation7], 1
    %s322 = scalar_lea.sflag [#allocation7], 1
    %323 = vsyncpa %s322, 1
    %324 = vsyncpa [#allocation5], 1
    %s325 = scalar_lea.sflag [#allocation5], 1
    %326 = vsyncpa %s325, 1

</llo_original>
